<compile_context>
chip_gen: v7x
topology: tpu7x:2x2x1
jax: 0.10.0
libtpu: 0.0.40
codegen_flags: <defaults>
</compile_context>

<pallas_src>
import jax
import jax.numpy as jnp
from jax.experimental import pallas as pl
from jax.experimental.pallas import tpu as pltpu


def _aggregation_kernel(adj_ref, x_ref, out_ref):
    """Compute one (tm, tf) output tile; grid axis 2 is the K reduction."""
    k = pl.program_id(2)
    prod = jnp.dot(adj_ref[...], x_ref[...], preferred_element_type=jnp.float32)

    # Accumulate directly into the resident output tile (out BlockSpec does not
    # depend on k, so the block stays in VMEM across the reduction axis).
    @pl.when(k == 0)
    def _():
        out_ref[...] = prod

    @pl.when(k > 0)
    def _():
        out_ref[...] += prod


def _round_up(x, m):
    return (x + m - 1) // m * m


def _tile_and_pad(dim, pref, align):
    """Pick a tile size (pref, or the align-rounded dim if smaller) and the
    padded array extent (a multiple of the tile)."""
    aligned = _round_up(dim, align)
    tile = pref if aligned >= pref else aligned
    return tile, _round_up(aligned, tile)


def graph_aggregation(x, adj, *, tm=512, tk=1024, tf=512, cast_adj_to_bf16=False):
    """h_prime = adj @ x.  adj: (N, N), x: (N, F) -> (N, F) float32."""
    M, K = adj.shape
    K2, F = x.shape
    assert K == K2, "adj and input node counts must match"

    # Tile / pad choices: M (sublane, align 8), K (lane of adj + sublane of x,
    # align 128), F (lane, align 128).  Small dims become single full blocks.
    tm, m_pad = _tile_and_pad(M, tm, 8)
    tk, k_pad = _tile_and_pad(K, tk, 128)
    tf, f_pad = _tile_and_pad(F, tf, 128)

    adj_p = adj
    if (m_pad, k_pad) != (M, K):
        # Zero-padding the contraction axis (and extra output rows) is exact.
        adj_p = jnp.pad(adj, ((0, m_pad - M), (0, k_pad - K)))
    if cast_adj_to_bf16:
        # Exact for 0/1 adjacency values; halves the dominant HBM stream.
        adj_p = adj_p.astype(jnp.bfloat16)

    x_p = x
    if (k_pad, f_pad) != (K, F):
        x_p = jnp.pad(x, ((0, k_pad - K), (0, f_pad - F)))

    grid = (m_pad // tm, f_pad // tf, k_pad // tk)

    # Double-buffered f32 tiles for adj, x, out (+ headroom); safe on v7x's
    # 64 MiB physical VMEM and above v5e's 16 MiB scoped default.
    vmem_needed = 2 * 4 * (tm * tk + tk * tf + tm * tf)
    vmem_limit = min(max(vmem_needed + (16 << 20), 32 << 20), 48 << 20)

    out_padded = pl.pallas_call(
        _aggregation_kernel,
        out_shape=jax.ShapeDtypeStruct((m_pad, f_pad), jnp.float32),
        grid_spec=pltpu.PrefetchScalarGridSpec(
            num_scalar_prefetch=0,
            grid=grid,
            in_specs=[
                pl.BlockSpec((tm, tk), lambda i, j, k: (i, k)),  # adj tile
                pl.BlockSpec((tk, tf), lambda i, j, k: (k, j)),  # x tile
            ],
            out_specs=pl.BlockSpec((tm, tf), lambda i, j, k: (i, j)),
        ),
        compiler_params=pltpu.CompilerParams(
            dimension_semantics=("parallel", "parallel", "arbitrary"),
            vmem_limit_bytes=vmem_limit,
        ),
    )(adj_p, x_p)

    if (m_pad, f_pad) != (M, F):
        out_padded = out_padded[:M, :F]
    return out_padded


def reference(x, adj):
    return adj @ x


if __name__ == "__main__":
    key = jax.random.PRNGKey(0)
    k_adj, k_x, k_adj2, k_x2 = jax.random.split(key, 4)

    # Case 1: shapes matching GraphAggregationLayer(in_features=10) on a tiny graph.
    num_nodes, in_features = 16, 10
    adj = (jax.random.uniform(k_adj, (num_nodes, num_nodes)) < 0.3).astype(jnp.float32)
    x = jax.random.normal(k_x, (num_nodes, in_features), dtype=jnp.float32)

    out = jax.block_until_ready(graph_aggregation(x, adj))
    ref = reference(x, adj)
    assert out.shape == (num_nodes, in_features)
    assert jnp.allclose(out, ref, atol=1e-5, rtol=1e-5)

    # Case 2: non-(8,128)-aligned graph size to exercise the padding path.
    n2, f2 = 300, 10
    adj2 = (jax.random.uniform(k_adj2, (n2, n2)) < 0.1).astype(jnp.float32)
    x2 = jax.random.normal(k_x2, (n2, f2), dtype=jnp.float32)

    out2 = jax.block_until_ready(graph_aggregation(x2, adj2))
    ref2 = reference(x2, adj2)
    assert out2.shape == (n2, f2)
    assert jnp.allclose(out2, ref2, atol=1e-4, rtol=1e-4)

    print("KERNEL_OK")
</pallas_src>

<mosaic_0001>
module attributes {stable_mosaic.version = 11 : i64} {
  func.func @_aggregation_kernel(%arg0: i32, %arg1: i32, %arg2: i32, %arg3: memref<16x128xf32, #tpu.memory_space<vmem>>, %arg4: memref<128x128xf32, #tpu.memory_space<vmem>>, %arg5: memref<16x128xf32, #tpu.memory_space<vmem>>) attributes {dimension_semantics = [#tpu.dimension_semantics<parallel>, #tpu.dimension_semantics<parallel>, #tpu.dimension_semantics<arbitrary>], iteration_bounds = array<i64: 1, 1, 1>, scalar_prefetch = 0 : i64, scratch_operands = 0 : i64, tpu.core_type = #tpu.core_type<tc>, window_params = [{transform_indices = @transform_0, window_bounds = array<i64: 16, 128>}, {transform_indices = @transform_1, window_bounds = array<i64: 128, 128>}, {transform_indices = @transform_2, window_bounds = array<i64: 16, 128>}]} {
    %c0 = arith.constant 0 : index
    %c0_0 = arith.constant 0 : index
    %0 = vector.load %arg3[%c0, %c0_0] : memref<16x128xf32, #tpu.memory_space<vmem>>, vector<16x128xf32>
    %c0_1 = arith.constant 0 : index
    %c0_2 = arith.constant 0 : index
    %1 = vector.load %arg4[%c0_1, %c0_2] : memref<128x128xf32, #tpu.memory_space<vmem>>, vector<128x128xf32>
    %cst = arith.constant dense<0.000000e+00> : vector<16x128xf32>
    %2 = tpu.matmul %0, %1, %cst {dimension_numbers = #tpu.dot_dimension_numbers<[1], [0], [0], [1], [0, 0, 1, 1], [], []>} : vector<16x128xf32>, vector<128x128xf32>, vector<16x128xf32> -> vector<16x128xf32>
    %c0_i32 = arith.constant 0 : i32
    %3 = arith.cmpi eq, %arg2, %c0_i32 : i32
    %4 = arith.extui %3 : i1 to i32
    %c0_i32_3 = arith.constant 0 : i32
    %5 = arith.cmpi ne, %4, %c0_i32_3 : i32
    scf.if %5 {
      %c0_6 = arith.constant 0 : index
      %c0_7 = arith.constant 0 : index
      %9 = vector.load %arg5[%c0_6, %c0_7] : memref<16x128xf32, #tpu.memory_space<vmem>>, vector<16x128xf32>
      tpu.vector_store %arg5[%c0_6, %c0_7], %2 {strides = array<i32>} : memref<16x128xf32, #tpu.memory_space<vmem>>, vector<16x128xf32>,
    } else {
    }
    %c0_i32_4 = arith.constant 0 : i32
    %6 = arith.cmpi sgt, %arg2, %c0_i32_4 : i32
    %7 = arith.extui %6 : i1 to i32
    %c0_i32_5 = arith.constant 0 : i32
    %8 = arith.cmpi ne, %7, %c0_i32_5 : i32
    scf.if %8 {
      %c0_6 = arith.constant 0 : index
      %c0_7 = arith.constant 0 : index
      %9 = vector.load %arg5[%c0_6, %c0_7] : memref<16x128xf32, #tpu.memory_space<vmem>>, vector<16x128xf32>
      %10 = arith.addf %9, %2 : vector<16x128xf32>
      %c0_8 = arith.constant 0 : index
      %c0_9 = arith.constant 0 : index
      %11 = vector.load %arg5[%c0_8, %c0_9] : memref<16x128xf32, #tpu.memory_space<vmem>>, vector<16x128xf32>
      tpu.vector_store %arg5[%c0_8, %c0_9], %10 {strides = array<i32>} : memref<16x128xf32, #tpu.memory_space<vmem>>, vector<16x128xf32>,
    } else {
    }
    return
  }
  func.func @transform_0(%arg0: i32, %arg1: i32, %arg2: i32) -> (i32, i32) {
    %c0_i32 = arith.constant 0 : i32
    return %arg0, %arg2 : i32, i32
  }
  func.func @transform_1(%arg0: i32, %arg1: i32, %arg2: i32) -> (i32, i32) {
    %c0_i32 = arith.constant 0 : i32
    return %arg2, %arg1 : i32, i32
  }
  func.func @transform_2(%arg0: i32, %arg1: i32, %arg2: i32) -> (i32, i32) {
    %c0_i32 = arith.constant 0 : i32
    return %arg0, %arg1 : i32, i32
  }
}

</mosaic_0001>

<llo_original>
// kernel: tpu_custom_call.1
$region0: #{tpu_custom_call.1}
  #allocation0 [shape = 'u32[]', space=smem, size = 0x4, offset = 0x4, fixed_abs, tag = 'smem constant byte address 0x4 - core index']
  #allocation1 [shape = 'u32[144,128]{1,0:T(1,128)}', space=vmem, size = 0x12000, scoped, tag = 'internal scratch']
  %s0 = inlined_call_operand.hbm [shape: f32[16,128], index: 0, kind: input, shape index: {}]
  %s1 = inlined_call_operand.hbm [shape: f32[128,128], index: 1, kind: input, shape index: {}]
  %s2 = inlined_call_operand.hbm [shape: f32[16,128], index: 2, kind: output, shape index: {}]
  %s3 = sld [smem:[#allocation0]]
  $region34: #{tpu_custom_call.1} parent=0
    _
  %s5 = ssub.s32 1, %s3
  %s6 = scalar_select 0, %s5, %s3
  $region1: #{tpu_custom_call.1} parent=0
    #allocation2 [shape = 'u8[8192]{0}', space=vmem, size = 0x2000, scoped, tag = 'input window, operand 0, single buffered']
    #allocation3 [shape = 's32[1]{0}', space=sflag, size = 0x4, scoped, tag = 'scoped memory for tpu_custom_call.1']
    #allocation4 [shape = 's32[1]{0}', space=sflag, size = 0x4, scoped, tag = 'scoped memory for tpu_custom_call.1']
    #allocation5 [shape = 'u8[65536]{0}', space=vmem, size = 0x10000, scoped, tag = 'input window, operand 1, single buffered']
    #allocation6 [shape = 's32[1]{0}', space=sflag, size = 0x4, scoped, tag = 'scoped memory for tpu_custom_call.1']
    #allocation7 [shape = 'u8[8192]{0}', space=vmem, size = 0x2000, scoped, tag = 'output window, operand 0, single buffered']
    %7 = vsyncpa [#allocation3], 0
    %8 = vsyncpa [#allocation6], 0
    %9 = vsyncpa [#allocation4], 0
    // Predicated region
    $region2: #{tpu_custom_call.1} parent=1 // pred_check
      _
    $region3: #{tpu_custom_call.1} parent=1 // pred_check_branch
      %11 = sbr.rel (0) target = $region5
    $region4: #{tpu_custom_call.1} parent=1 // pred_region
      %s13 = ssub.s32 256, 256
      %14 = vsyncadd [#allocation3], %s13
      %s15 = sshll.u32 [#allocation2], 4
      %s16 = int_to_ptr.vmem [resolvable:$true] %s15
      %21 = dma.hbm_to_vmem [thread:$0]  %s0, 256, %s16, [#allocation3], 128, 128, 8
    $region5: #{tpu_custom_call.1} parent=1 // pred_fallthru
      _
    // Predicated region
    $region6: #{tpu_custom_call.1} parent=1 // pred_check
      _
    $region7: #{tpu_custom_call.1} parent=1 // pred_check_branch
      %23 = sbr.rel (0) target = $region9
    $region8: #{tpu_custom_call.1} parent=1 // pred_region
      %s25 = ssub.s32 2048, 2048
      %26 = vsyncadd [#allocation6], %s25
      %s27 = sshll.u32 [#allocation5], 4
      %s28 = int_to_ptr.vmem [resolvable:$true] %s27
      %33 = dma.hbm_to_vmem [thread:$0]  %s1, 2048, %s28, [#allocation6], 128, 128, 8
    $region9: #{tpu_custom_call.1} parent=1 // pred_fallthru
      _
    // Predicated region
    $region10: #{tpu_custom_call.1} parent=1 // pred_check
      _
    $region11: #{tpu_custom_call.1} parent=1 // pred_check_branch
      %35 = sbr.rel (0) target = $region13
    $region12: #{tpu_custom_call.1} parent=1 // pred_region
      %36 = dma.done [#allocation3], 256
    $region13: #{tpu_custom_call.1} parent=1 // pred_fallthru
      _
    // Predicated region
    $region14: #{tpu_custom_call.1} parent=1 // pred_check
      _
    $region15: #{tpu_custom_call.1} parent=1 // pred_check_branch
      %38 = sbr.rel (0) target = $region17
    $region16: #{tpu_custom_call.1} parent=1 // pred_region
      %39 = dma.done [#allocation6], 2048
    $region17: #{tpu_custom_call.1} parent=1 // pred_fallthru
      _
    %v40 = vld [vmem:[#allocation2] sm:$0xff]
    %v41 = vld [vmem:[#allocation2 + $0x8] sm:$0xff]
    %v42 = vld [vmem:[#allocation5] sm:$0xff]
    %v43 = vld [vmem:[#allocation5 + $0x8] sm:$0xff]
    %v44 = vld [vmem:[#allocation5 + $0x10] sm:$0xff]
    %v45 = vld [vmem:[#allocation5 + $0x18] sm:$0xff]
    %v46 = vld [vmem:[#allocation5 + $0x20] sm:$0xff]
    %v47 = vld [vmem:[#allocation5 + $0x28] sm:$0xff]
    %v48 = vld [vmem:[#allocation5 + $0x30] sm:$0xff]
    %v49 = vld [vmem:[#allocation5 + $0x38] sm:$0xff]
    %v50 = vld [vmem:[#allocation5 + $0x40] sm:$0xff]
    %v51 = vld [vmem:[#allocation5 + $0x48] sm:$0xff]
    %v52 = vld [vmem:[#allocation5 + $0x50] sm:$0xff]
    %v53 = vld [vmem:[#allocation5 + $0x58] sm:$0xff]
    %v54 = vld [vmem:[#allocation5 + $0x60] sm:$0xff]
    %v55 = vld [vmem:[#allocation5 + $0x68] sm:$0xff]
    %v56 = vld [vmem:[#allocation5 + $0x70] sm:$0xff]
    %v57 = vld [vmem:[#allocation5 + $0x78] sm:$0xff]
    %58 = vmatprep.subr.mxu0 0.0
    %59 = vmatpush1.msra.mxu0 %v42
    %60 = vmatprep.subr.mxu0 0.0
    %61 = vmatpush1.msra.mxu0 %v43
    %62 = vmatprep.subr.mxu0 0.0
    %63 = vmatpush1.msra.mxu0 %v44
    %64 = vmatprep.subr.mxu0 0.0
    %65 = vmatpush1.msra.mxu0 %v45
    %66 = vmatprep.subr.mxu0 0.0
    %67 = vmatpush1.msra.mxu0 %v46
    %68 = vmatprep.subr.mxu0 0.0
    %69 = vmatpush1.msra.mxu0 %v47
    %70 = vmatprep.subr.mxu0 0.0
    %71 = vmatpush1.msra.mxu0 %v48
    %72 = vmatprep.subr.mxu0 0.0
    %73 = vmatpush1.msra.mxu0 %v49
    %74 = vmatprep.subr.mxu0 0.0
    %75 = vmatpush1.msra.mxu0 %v50
    %76 = vmatprep.subr.mxu0 0.0
    %77 = vmatpush1.msra.mxu0 %v51
    %78 = vmatprep.subr.mxu0 0.0
    %79 = vmatpush1.msra.mxu0 %v52
    %80 = vmatprep.subr.mxu0 0.0
    %81 = vmatpush1.msra.mxu0 %v53
    %82 = vmatprep.subr.mxu0 0.0
    %83 = vmatpush1.msra.mxu0 %v54
    %84 = vmatprep.subr.mxu0 0.0
    %85 = vmatpush1.msra.mxu0 %v55
    %86 = vmatprep.subr.mxu0 0.0
    %87 = vmatpush1.msra.mxu0 %v56
    %88 = vmatprep.subr.mxu0 0.0
    %89 = vmatpush1.msra.mxu0 %v57
    %90 = vmatprep.subr.mxu0 0.0
    %91 = vmatpush1.msra.mxu0 0.0
    %92 = vmatprep.subr.mxu0 0.0
    %93 = vmatpush1.msra.mxu0 0.0
    %94 = vmatprep.subr.mxu0 0.0
    %95 = vmatpush1.msra.mxu0 0.0
    %96 = vmatprep.subr.mxu0 0.0
    %97 = vmatpush1.msra.mxu0 0.0
    %98 = vmatprep.subr.mxu0 0.0
    %99 = vmatpush1.msra.mxu0 0.0
    %100 = vmatprep.subr.mxu0 0.0
    %101 = vmatpush1.msra.mxu0 0.0
    %102 = vmatprep.subr.mxu0 0.0
    %103 = vmatpush1.msra.mxu0 0.0
    %104 = vmatprep.subr.mxu0 0.0
    %105 = vmatpush1.msra.mxu0 0.0
    %106 = vmatprep.subr.mxu0 0.0
    %107 = vmatpush1.msra.mxu0 0.0
    %108 = vmatprep.subr.mxu0 0.0
    %109 = vmatpush1.msra.mxu0 0.0
    %110 = vmatprep.subr.mxu0 0.0
    %111 = vmatpush1.msra.mxu0 0.0
    %112 = vmatprep.subr.mxu0 0.0
    %113 = vmatpush1.msra.mxu0 0.0
    %114 = vmatprep.subr.mxu0 0.0
    %115 = vmatpush1.msra.mxu0 0.0
    %116 = vmatprep.subr.mxu0 0.0
    %117 = vmatpush1.msra.mxu0 0.0
    %118 = vmatprep.subr.mxu0 0.0
    %119 = vmatpush1.msra.mxu0 0.0
    %120 = vmatprep.subr.mxu0 0.0
    %121 = vmatpush1.msra.mxu0 0.0
    %122 = vmatprep.mubr.f32.mxu0 0.0
    %123 = vmatmul.mubr.f32.gmra.mrb[0].mxu0 %v40
    %v124 = vpop.f32.mrb[0].mxu0
    %v125 = vadd.f32 0.0, %v124
    %v126 = vpop.f32.mrb[0].mxu0
    %127 = vmatprep.mubr.f32.mxu0 0.0
    %128 = vmatmul.mubr.f32.gmra.mrb[0].mxu0 %v41
    %v129 = vpop.f32.mrb[0].mxu0
    %v130 = vadd.f32 0.0, %v129
    %v131 = vpop.f32.mrb[0].mxu0
    %132 = vdwg.mxu0
    %p133 = scmp.eq.s32.totalorder 0, 0
    // Predicated region
    $region18: #{tpu_custom_call.1} parent=1 // pred_check
      %p134 = pneg %p133
    $region19: #{tpu_custom_call.1} parent=1 // pred_check_branch
      %136 = sbr.rel (%p134) target = $region21
    $region20: #{tpu_custom_call.1} parent=1 // pred_region
      %137 = vst [vmem:[#allocation7] sm:$0xff] %v125
      %138 = vst [vmem:[#allocation7 + $0x8] sm:$0xff] %v130
    $region21: #{tpu_custom_call.1} parent=1 // pred_fallthru
      _
    %p139 = scmp.gt.s32.totalorder 0, 0
    // Predicated region
    $region22: #{tpu_custom_call.1} parent=1 // pred_check
      %p140 = pneg %p139
    $region23: #{tpu_custom_call.1} parent=1 // pred_check_branch
      %142 = sbr.rel (%p140) target = $region25
    $region24: #{tpu_custom_call.1} parent=1 // pred_region
      %v143 = vld [vmem:[#allocation7] sm:$0xff]
      %v144 = vld [vmem:[#allocation7 + $0x8] sm:$0xff]
      %v145 = vadd.f32 %v143, %v125
      %v146 = vadd.f32 %v144, %v130
      %147 = vst [vmem:[#allocation7] sm:$0xff] %v145
      %148 = vst [vmem:[#allocation7 + $0x8] sm:$0xff] %v146
    $region25: #{tpu_custom_call.1} parent=1 // pred_fallthru
      _
    // Predicated region
    $region26: #{tpu_custom_call.1} parent=1 // pred_check
      _
    $region27: #{tpu_custom_call.1} parent=1 // pred_check_branch
      %150 = sbr.rel (0) target = $region29
    $region28: #{tpu_custom_call.1} parent=1 // pred_region
      %s152 = ssub.s32 256, 256
      %153 = vsyncadd [#allocation4], %s152
      %s154 = sshll.u32 [#allocation7], 4
      %s155 = int_to_ptr.vmem [resolvable:$true] %s154
      %160 = dma.vmem_to_hbm [thread:$0]  %s155, 256, %s2, [#allocation4], 128, 128, 8
    $region29: #{tpu_custom_call.1} parent=1 // pred_fallthru
      _
    // Predicated region
    $region30: #{tpu_custom_call.1} parent=1 // pred_check
      _
    $region31: #{tpu_custom_call.1} parent=1 // pred_check_branch
      %162 = sbr.rel (0) target = $region33
    $region32: #{tpu_custom_call.1} parent=1 // pred_region
      %163 = dma.done [#allocation4], 256
    $region33: #{tpu_custom_call.1} parent=1 // pred_fallthru
      _
    %164 = vsyncpa [#allocation3], 1
    %165 = vsyncpa [#allocation6], 1
    %166 = vsyncpa [#allocation4], 1

</llo_original>
